<compile_context>
chip_gen: v7x
topology: tpu7x:2x2x1
jax: 0.10.0
libtpu: 0.0.40
codegen_flags: <defaults>
</compile_context>

<pallas_src>
import functools

import jax
import jax.numpy as jnp
from jax.experimental import pallas as pl
from jax.experimental.pallas import tpu as pltpu


def attention_kernel(x_ref, w_ref, o_ref, m_sc, l_sc, acc_sc, *,
                     block_t, t_total, mask_t):
    """One (block_b, block_t, H) tile of lstm_out; online softmax over T."""
    t = pl.program_id(1)

    @pl.when(t == 0)
    def _():
        m_sc[...] = jnp.full_like(m_sc, -jnp.inf)
        l_sc[...] = jnp.zeros_like(l_sc)
        acc_sc[...] = jnp.zeros_like(acc_sc)

    x = x_ref[...].astype(jnp.float32)           # (BB, Tt, H)
    w = w_ref[...]                               # (1, H)

    if mask_t:
        # Ragged T tail: zero out-of-range time steps so they contribute
        # nothing (x -> 0, score -> -inf -> e -> 0).
        t_idx = t * block_t + jax.lax.broadcasted_iota(
            jnp.int32, (1, block_t, 1), 1)
        valid = t_idx < t_total
        x = jnp.where(valid, x, 0.0)

    # scores = <x, w>  (bias omitted: softmax over T is shift-invariant).
    # VPU multiply + lane reduce; no MXU for a degenerate N=1 matmul.
    scores = jnp.sum(x * w[None, :, :], axis=-1, keepdims=True)   # (BB, Tt, 1)
    if mask_t:
        scores = jnp.where(valid, scores, -jnp.inf)

    m_prev = m_sc[...]                                             # (BB, 1)
    m_new = jnp.maximum(m_prev, jnp.max(scores, axis=1))           # (BB, 1)
    alpha = jnp.exp(m_prev - m_new)                                # (BB, 1)
    e = jnp.exp(scores - m_new[:, None, :])                        # (BB, Tt, 1)

    l_sc[...] = alpha * l_sc[...] + jnp.sum(e, axis=1)             # (BB, 1)
    acc_sc[...] = alpha * acc_sc[...] + jnp.sum(e * x, axis=1)     # (BB, H)
    m_sc[...] = m_new

    @pl.when(t == pl.num_programs(1) - 1)
    def _():
        # Exact divide: once per block on a small array, off the critical path.
        o_ref[...] = (acc_sc[...] / l_sc[...]).astype(o_ref.dtype)


def _choose_tiles(B, T, H, itemsize, target_bytes):
    """Pick (block_b, block_t) so the x block is ~target_bytes and every
    block dim is either a multiple of 8 or the full array extent."""
    row_bytes = T * H * itemsize
    rows_fit = target_bytes // row_bytes if row_bytes > 0 else B

    if rows_fit >= 1:
        # Whole-T block; tile only the batch axis.
        block_t = T
        if rows_fit >= B:
            block_b = B
            if B >= 16:
                # Give v7x's two TensorCores at least two grid steps.
                half = max(8, ((pl.cdiv(B, 2) + 7) // 8) * 8)
                if half < B:
                    block_b = half
        else:
            block_b = min(B, max(8, (rows_fit // 8) * 8))
        return block_b, block_t

    # Long-sequence path: small batch block, tile T (online softmax).
    block_b = B if B < 8 else 8
    t_fit = max(1, target_bytes // (block_b * H * itemsize))
    if t_fit >= T:
        block_t = T
    else:
        block_t = min(T, max(8, (t_fit // 8) * 8))
    return block_b, block_t


def attention_forward(lstm_out, w, b=None, *, target_block_bytes=2 << 20):
    """lstm_out: (B, T, H); w: (H, 1); b: (1, 1) (unused) -> (B, H)."""
    del b  # softmax over T is shift-invariant; adding b to every score is a no-op.
    B, T, H = lstm_out.shape
    itemsize = jnp.dtype(lstm_out.dtype).itemsize

    block_b, block_t = _choose_tiles(B, T, H, itemsize, target_block_bytes)
    assert block_b == B or block_b % 8 == 0
    assert block_t == T or block_t % 8 == 0

    grid = (pl.cdiv(B, block_b), pl.cdiv(T, block_t))
    mask_t = (T % block_t) != 0

    w_row = jnp.asarray(w).reshape(1, H).astype(jnp.float32)

    # Explicit VMEM budget: double-buffered x/out blocks + scratch + headroom.
    x_block_bytes = block_b * block_t * H * itemsize
    out_block_bytes = block_b * H * itemsize
    scratch_bytes = block_b * (H + 2) * 4
    vmem_limit = 2 * x_block_bytes + 2 * out_block_bytes + scratch_bytes \
        + H * 4 + (4 << 20)
    vmem_limit = int(min(max(vmem_limit, 16 << 20), 48 << 20))

    kernel = functools.partial(
        attention_kernel, block_t=block_t, t_total=T, mask_t=mask_t)

    out = pl.pallas_call(
        kernel,
        out_shape=jax.ShapeDtypeStruct((B, H), lstm_out.dtype),
        grid=grid,
        in_specs=[
            pl.BlockSpec((block_b, block_t, H), lambda i, t: (i, t, 0)),
            pl.BlockSpec((1, H), lambda i, t: (0, 0)),
        ],
        out_specs=pl.BlockSpec((block_b, H), lambda i, t: (i, 0)),
        scratch_shapes=[
            pltpu.VMEM((block_b, 1), jnp.float32),   # running max
            pltpu.VMEM((block_b, 1), jnp.float32),   # running denom
            pltpu.VMEM((block_b, H), jnp.float32),   # running context
        ],
        compiler_params=pltpu.CompilerParams(
            dimension_semantics=("parallel", "arbitrary"),
            vmem_limit_bytes=vmem_limit,
        ),
        cost_estimate=pl.CostEstimate(
            flops=4 * B * T * H,
            transcendentals=B * T,
            bytes_accessed=B * T * H * itemsize + B * H * itemsize + H * 4,
        ),
    )(lstm_out, w_row)
    return out


def attention_reference(lstm_out, w, b):
    scores = jnp.einsum("bth,ho->bto", lstm_out, w) + b[0, 0]   # (B, T, 1)
    weights = jax.nn.softmax(scores, axis=1)
    return jnp.sum(weights * lstm_out, axis=1)                  # (B, H)


def _run_case(key, B, T, H, **fwd_kwargs):
    kx, kw, kb = jax.random.split(key, 3)
    lstm_out = jax.random.normal(kx, (B, T, H), dtype=jnp.float32)
    w = jax.random.normal(kw, (H, 1), dtype=jnp.float32) * 0.1
    b = jax.random.normal(kb, (1, 1), dtype=jnp.float32) * 0.1

    out = jax.block_until_ready(attention_forward(lstm_out, w, b, **fwd_kwargs))
    ref = attention_reference(lstm_out, w, b)
    assert out.shape == (B, H)
    assert jnp.allclose(out, ref, atol=1e-5, rtol=1e-5), \
        f"mismatch vs reference for shape {(B, T, H)}"


if __name__ == "__main__":
    key = jax.random.PRNGKey(0)
    k0, k1, k2 = jax.random.split(key, 3)

    # nn.Linear(hidden_dim, 1): weight (1, H), bias (1,). Stored here as
    # w: (H, 1), b: (1, 1) for the wrapper.
    # 1) Module-consistent small shape (single block, H not a multiple of 128).
    _run_case(k0, B=2, T=8, H=32)
    # 2) Ragged batch tail + multi-step batch grid (no padding copy).
    _run_case(k1, B=20, T=16, H=96)
    # 3) Forced T tiling: online softmax across T blocks with a ragged T tail.
    _run_case(k2, B=4, T=60, H=128, target_block_bytes=16 * 1024)

    print("KERNEL_OK")
</pallas_src>

<mosaic_0001>
module attributes {stable_mosaic.version = 11 : i64} {
  func.func @attention_kernel(%arg0: i32, %arg1: i32, %arg2: memref<2x8x32xf32, #tpu.memory_space<vmem>>, %arg3: memref<1x32xf32, #tpu.memory_space<vmem>>, %arg4: memref<2x32xf32, #tpu.memory_space<vmem>>, %arg5: memref<2x1xf32, #tpu.memory_space<vmem>>, %arg6: memref<2x1xf32, #tpu.memory_space<vmem>>, %arg7: memref<2x32xf32, #tpu.memory_space<vmem>>) attributes {dimension_semantics = [#tpu.dimension_semantics<parallel>, #tpu.dimension_semantics<arbitrary>], iteration_bounds = array<i64: 1, 1>, scalar_prefetch = 0 : i64, scratch_operands = 3 : i64, tpu.core_type = #tpu.core_type<tc>, window_params = [{transform_indices = @transform_0, window_bounds = array<i64: 2, 8, 32>}, {pipeline_mode = #tpu.pipeline_mode<synchronous>, transform_indices = @transform_1, window_bounds = array<i64: 1, 32>}, {transform_indices = @transform_2, window_bounds = array<i64: 2, 32>}]} {
    %c0_i32 = arith.constant 0 : i32
    %0 = arith.cmpi eq, %arg1, %c0_i32 : i32
    %1 = arith.extui %0 : i1 to i32
    %c0_i32_0 = arith.constant 0 : i32
    %2 = arith.cmpi ne, %1, %c0_i32_0 : i32
    scf.if %2 {
      %cst_22 = arith.constant 0xFF800000 : f32
      %36 = vector.broadcast %cst_22 : f32 to vector<2x1xf32>
      %c0_23 = arith.constant 0 : index
      %c0_24 = arith.constant 0 : index
      %37 = vector.load %arg5[%c0_23, %c0_24] : memref<2x1xf32, #tpu.memory_space<vmem>>, vector<2x1xf32>
      tpu.vector_store %arg5[%c0_23, %c0_24], %36 {strides = array<i32>} : memref<2x1xf32, #tpu.memory_space<vmem>>, vector<2x1xf32>,
      %cst_25 = arith.constant 0.000000e+00 : f32
      %38 = vector.broadcast %cst_25 : f32 to vector<2x1xf32>
      %c0_26 = arith.constant 0 : index
      %c0_27 = arith.constant 0 : index
      %39 = vector.load %arg6[%c0_26, %c0_27] : memref<2x1xf32, #tpu.memory_space<vmem>>, vector<2x1xf32>
      tpu.vector_store %arg6[%c0_26, %c0_27], %38 {strides = array<i32>} : memref<2x1xf32, #tpu.memory_space<vmem>>, vector<2x1xf32>,
      %cst_28 = arith.constant 0.000000e+00 : f32
      %40 = vector.broadcast %cst_28 : f32 to vector<2x32xf32>
      %c0_29 = arith.constant 0 : index
      %c0_30 = arith.constant 0 : index
      %41 = vector.load %arg7[%c0_29, %c0_30] : memref<2x32xf32, #tpu.memory_space<vmem>>, vector<2x32xf32>
      tpu.vector_store %arg7[%c0_29, %c0_30], %40 {strides = array<i32>} : memref<2x32xf32, #tpu.memory_space<vmem>>, vector<2x32xf32>,
    } else {
    }
    %c0 = arith.constant 0 : index
    %c0_1 = arith.constant 0 : index
    %c0_2 = arith.constant 0 : index
    %3 = vector.load %arg2[%c0, %c0_1, %c0_2] : memref<2x8x32xf32, #tpu.memory_space<vmem>>, vector<2x8x32xf32>
    %c0_3 = arith.constant 0 : index
    %c0_4 = arith.constant 0 : index
    %4 = vector.load %arg3[%c0_3, %c0_4] : memref<1x32xf32, #tpu.memory_space<vmem>>, vector<1x32xf32>
    %5 = vector.shape_cast %4 : vector<1x32xf32> to vector<1x1x32xf32>
    %6 = vector.broadcast %5 : vector<1x1x32xf32> to vector<2x8x32xf32>
    %7 = arith.mulf %3, %6 : vector<2x8x32xf32>
    %cst = arith.constant dense<0.000000e+00> : vector<2x8xf32>
    %8 = vector.multi_reduction <add>, %7, %cst [2] : vector<2x8x32xf32> to vector<2x8xf32>
    %9 = vector.shape_cast %8 : vector<2x8xf32> to vector<2x8x1xf32>
    %c0_5 = arith.constant 0 : index
    %c0_6 = arith.constant 0 : index
    %10 = vector.load %arg5[%c0_5, %c0_6] : memref<2x1xf32, #tpu.memory_space<vmem>>, vector<2x1xf32>
    %cst_7 = arith.constant dense<0xFF800000> : vector<2x1xf32>
    %11 = vector.multi_reduction <maximumf>, %9, %cst_7 [1] : vector<2x8x1xf32> to vector<2x1xf32>
    %12 = arith.maximumf %10, %11 : vector<2x1xf32>
    %13 = arith.subf %10, %12 : vector<2x1xf32>
    %14 = math.exp %13 : vector<2x1xf32>
    %15 = vector.shape_cast %12 : vector<2x1xf32> to vector<2x1x1xf32>
    %16 = vector.broadcast %15 : vector<2x1x1xf32> to vector<2x8x1xf32>
    %17 = arith.subf %9, %16 : vector<2x8x1xf32>
    %18 = math.exp %17 : vector<2x8x1xf32>
    %c0_8 = arith.constant 0 : index
    %c0_9 = arith.constant 0 : index
    %19 = vector.load %arg6[%c0_8, %c0_9] : memref<2x1xf32, #tpu.memory_space<vmem>>, vector<2x1xf32>
    %20 = arith.mulf %14, %19 : vector<2x1xf32>
    %cst_10 = arith.constant dense<0.000000e+00> : vector<2x1xf32>
    %21 = vector.multi_reduction <add>, %18, %cst_10 [1] : vector<2x8x1xf32> to vector<2x1xf32>
    %22 = arith.addf %20, %21 : vector<2x1xf32>
    %c0_11 = arith.constant 0 : index
    %c0_12 = arith.constant 0 : index
    %23 = vector.load %arg6[%c0_11, %c0_12] : memref<2x1xf32, #tpu.memory_space<vmem>>, vector<2x1xf32>
    tpu.vector_store %arg6[%c0_11, %c0_12], %22 {strides = array<i32>} : memref<2x1xf32, #tpu.memory_space<vmem>>, vector<2x1xf32>,
    %c0_13 = arith.constant 0 : index
    %c0_14 = arith.constant 0 : index
    %24 = vector.load %arg7[%c0_13, %c0_14] : memref<2x32xf32, #tpu.memory_space<vmem>>, vector<2x32xf32>
    %25 = vector.broadcast %14 : vector<2x1xf32> to vector<2x32xf32>
    %26 = arith.mulf %25, %24 : vector<2x32xf32>
    %27 = vector.broadcast %18 : vector<2x8x1xf32> to vector<2x8x32xf32>
    %28 = arith.mulf %27, %3 : vector<2x8x32xf32>
    %cst_15 = arith.constant dense<0.000000e+00> : vector<2x32xf32>
    %29 = vector.multi_reduction <add>, %28, %cst_15 [1] : vector<2x8x32xf32> to vector<2x32xf32>
    %30 = arith.addf %26, %29 : vector<2x32xf32>
    %c0_16 = arith.constant 0 : index
    %c0_17 = arith.constant 0 : index
    %31 = vector.load %arg7[%c0_16, %c0_17] : memref<2x32xf32, #tpu.memory_space<vmem>>, vector<2x32xf32>
    tpu.vector_store %arg7[%c0_16, %c0_17], %30 {strides = array<i32>} : memref<2x32xf32, #tpu.memory_space<vmem>>, vector<2x32xf32>,
    %c0_18 = arith.constant 0 : index
    %c0_19 = arith.constant 0 : index
    %32 = vector.load %arg5[%c0_18, %c0_19] : memref<2x1xf32, #tpu.memory_space<vmem>>, vector<2x1xf32>
    tpu.vector_store %arg5[%c0_18, %c0_19], %12 {strides = array<i32>} : memref<2x1xf32, #tpu.memory_space<vmem>>, vector<2x1xf32>,
    %c0_i32_20 = arith.constant 0 : i32
    %33 = arith.cmpi eq, %arg1, %c0_i32_20 : i32
    %34 = arith.extui %33 : i1 to i32
    %c0_i32_21 = arith.constant 0 : i32
    %35 = arith.cmpi ne, %34, %c0_i32_21 : i32
    scf.if %35 {
      %c0_22 = arith.constant 0 : index
      %c0_23 = arith.constant 0 : index
      %36 = vector.load %arg7[%c0_22, %c0_23] : memref<2x32xf32, #tpu.memory_space<vmem>>, vector<2x32xf32>
      %c0_24 = arith.constant 0 : index
      %c0_25 = arith.constant 0 : index
      %37 = vector.load %arg6[%c0_24, %c0_25] : memref<2x1xf32, #tpu.memory_space<vmem>>, vector<2x1xf32>
      %38 = vector.broadcast %37 : vector<2x1xf32> to vector<2x32xf32>
      %39 = arith.divf %36, %38 : vector<2x32xf32>
      %c0_26 = arith.constant 0 : index
      %c0_27 = arith.constant 0 : index
      %40 = vector.load %arg4[%c0_26, %c0_27] : memref<2x32xf32, #tpu.memory_space<vmem>>, vector<2x32xf32>
      tpu.vector_store %arg4[%c0_26, %c0_27], %39 {strides = array<i32>} : memref<2x32xf32, #tpu.memory_space<vmem>>, vector<2x32xf32>,
    } else {
    }
    return
  }
  func.func @transform_0(%arg0: i32, %arg1: i32) -> (i32, i32, i32) {
    %c0_i32 = arith.constant 0 : i32
    %c0_i32_0 = arith.constant 0 : i32
    return %arg0, %arg1, %c0_i32 : i32, i32, i32
  }
  func.func @transform_1(%arg0: i32, %arg1: i32) -> (i32, i32) {
    %c0_i32 = arith.constant 0 : i32
    %c0_i32_0 = arith.constant 0 : i32
    %c0_i32_1 = arith.constant 0 : i32
    return %c0_i32, %c0_i32_0 : i32, i32
  }
  func.func @transform_2(%arg0: i32, %arg1: i32) -> (i32, i32) {
    %c0_i32 = arith.constant 0 : i32
    %c0_i32_0 = arith.constant 0 : i32
    return %arg0, %c0_i32 : i32, i32
  }
}

</mosaic_0001>

<llo_original>
// kernel: tpu_custom_call.1
$region0: #{tpu_custom_call.1}
  #allocation0 [shape = 'u32[]', space=smem, size = 0x4, offset = 0x4, fixed_abs, tag = 'smem constant byte address 0x4 - core index']
  #allocation1 [shape = 'u32[144,128]{1,0:T(1,128)}', space=vmem, size = 0x12000, scoped, tag = 'internal scratch']
  #allocation2 [shape = 'f32[2,1]{1,0:T(2,128)}', space=vmem, size = 0x400, scoped, tag = 'scratch operand']
  #allocation3 [shape = 'f32[2,1]{1,0:T(2,128)}', space=vmem, size = 0x400, scoped, tag = 'scratch operand']
  #allocation4 [shape = 'f32[2,32]{1,0:T(2,128)}', space=vmem, size = 0x400, scoped, tag = 'scratch operand']
  %s0 = inlined_call_operand.hbm [shape: f32[2,8,32], index: 0, kind: input, shape index: {}]
  %s1 = inlined_call_operand.vmem [shape: f32[1,32], index: 1, kind: input, shape index: {}]
  %s2 = inlined_call_operand.hbm [shape: f32[2,32], index: 2, kind: output, shape index: {}]
  %s3 = sld [smem:[#allocation0]]
  $region30: #{tpu_custom_call.1} parent=0
    _
  %s5 = ssub.s32 1, %s3
  %s6 = scalar_select 0, %s5, %s3
  $region1: #{tpu_custom_call.1} parent=0
    #allocation5 [shape = 'u8[8192]{0}', space=vmem, size = 0x2000, scoped, tag = 'input window, operand 0, single buffered']
    #allocation6 [shape = 's32[1]{0}', space=sflag, size = 0x4, scoped, tag = 'scoped memory for tpu_custom_call.1']
    #allocation7 [shape = 's32[1]{0}', space=sflag, size = 0x4, scoped, tag = 'scoped memory for tpu_custom_call.1']
    #allocation8 [shape = 'u8[1024]{0}', space=vmem, size = 0x400, scoped, tag = 'output window, operand 0, single buffered']
    %7 = vsyncpa [#allocation6], 0
    %8 = vsyncpa [#allocation7], 0
    // Predicated region
    $region2: #{tpu_custom_call.1} parent=1 // pred_check
      _
    $region3: #{tpu_custom_call.1} parent=1 // pred_check_branch
      %10 = sbr.rel (0) target = $region5
    $region4: #{tpu_custom_call.1} parent=1 // pred_region
      %s12 = ssub.s32 256, 256
      %13 = vsyncadd [#allocation6], %s12
      %s14 = sshll.u32 [#allocation5], 4
      %s15 = int_to_ptr.vmem [resolvable:$true] %s14
      %20 = dma.hbm_to_vmem [thread:$0]  %s0, 256, %s15, [#allocation6], 128, 128, 8
    $region5: #{tpu_custom_call.1} parent=1 // pred_fallthru
      _
    // Predicated region
    $region6: #{tpu_custom_call.1} parent=1 // pred_check
      _
    $region7: #{tpu_custom_call.1} parent=1 // pred_check_branch
      %22 = sbr.rel (0) target = $region9
    $region8: #{tpu_custom_call.1} parent=1 // pred_region
      _
    $region9: #{tpu_custom_call.1} parent=1 // pred_fallthru
      _
    // Predicated region
    $region10: #{tpu_custom_call.1} parent=1 // pred_check
      _
    $region11: #{tpu_custom_call.1} parent=1 // pred_check_branch
      %24 = sbr.rel (0) target = $region13
    $region12: #{tpu_custom_call.1} parent=1 // pred_region
      %25 = dma.done [#allocation6], 256
    $region13: #{tpu_custom_call.1} parent=1 // pred_fallthru
      _
    %p26 = scmp.eq.s32.totalorder 0, 0
    // Predicated region
    $region14: #{tpu_custom_call.1} parent=1 // pred_check
      %p27 = pneg %p26
    $region15: #{tpu_custom_call.1} parent=1 // pred_check_branch
      %29 = sbr.rel (%p27) target = $region17
    $region16: #{tpu_custom_call.1} parent=1 // pred_region
      %vm30 = vcmask 1024
      %31 = vst.msk [vmem:[#allocation2] sm:$0x3] %vm30, -inf
      %32 = vst.msk [vmem:[#allocation3] sm:$0x3] %vm30, 0.0
      %vm33 = vcmask 254976
      %34 = vst.msk [vmem:[#allocation4] sm:$0x3] %vm33, 0.0
    $region17: #{tpu_custom_call.1} parent=1 // pred_fallthru
      _
    %v35 = vld [vmem:[#allocation5] sm:$0xff]
    %v36 = vld [vmem:[#allocation5 + $0x8] sm:$0xff]
    %v37 = vld [vmem:[%s1] sm:$0x1]
    %v39 = vlaneseq
    %v40 = vshrl.u32 %v39, 7
    %v41 = vsub.s32 0, %v40
    %v42 = vrot.slane %v37, %v41
    %v44 = vmul.f32 %v35, %v42
    %v45 = vmul.f32 %v36, %v42
    %vm46 = vcmask 261120
    %v47 = vsel %vm46, %v44, 0.0
    %48 = vadd.xlane.f32.xlu0 %v47
    %v49 = vpop.xlane.xlu0 %48
    %v50 = vsel %vm46, %v45, 0.0
    %51 = vadd.xlane.f32.xlu0 %v50
    %v52 = vpop.xlane.xlu0 %51
    %v53 = vld [vmem:[#allocation2] sm:$0x3]
    %v54 = vrot.slane %v49, 4
    %v55 = vmax.f32 %v49, %v54
    %v56 = vrot.slane %v55, 2
    %v57 = vmax.f32 %v55, %v56
    %v58 = vrot.slane %v57, 1
    %v59 = vmax.f32 %v57, %v58
    %v60 = vrot.slane %v52, 4
    %v61 = vmax.f32 %v52, %v60
    %v62 = vrot.slane %v61, 2
    %v63 = vmax.f32 %v61, %v62
    %v64 = vrot.slane %v63, 1
    %v65 = vmax.f32 %v63, %v64
    %vm68 = vcmask 1041409
    %v69 = vsel %vm68, %v65, %v59
    %v71 = vmax.f32 %v53, %v69
    %v72 = vsub.f32 %v53, %v71
    %v73 = vmul.f32 %v72, 1.442695
    %v74 = vpow.pop %v73
    %v77 = vunpack.c.l.s4 1966171168
    %v78 = vunpack.c.0.s8 %v77
    %v79 = vlaneseq
    %v80 = vshrl.u32 %v79, 7
    %v81 = vsub.s32 %v78, %v80
    %v82 = vrot.slane %v71, %v81
    %v83 = vcombine.high %v82, %v82
    %v85 = vunpack.c.l.s4 1966171168
    %v86 = vunpack.c.0.s8 %v85
    %v87 = vlaneseq
    %v88 = vshrl.u32 %v87, 7
    %v89 = vsub.s32 %v86, %v88
    %v90 = vrot.slane %v82, %v89
    %v92 = vunpack.c.l.s4 1966171168
    %v93 = vunpack.c.0.s8 %v92
    %v94 = vlaneseq
    %v95 = vshrl.u32 %v94, 7
    %v96 = vsub.s32 %v93, %v95
    %v97 = vrot.slane %v83, %v96
    %v98 = vlaneseq
    %v99 = vshrl.u32 %v98, 7
    %v100 = vsub.s32 0, %v99
    %v101 = vrot.slane %v90, %v100
    %v102 = vlaneseq
    %v103 = vshrl.u32 %v102, 7
    %v104 = vsub.s32 0, %v103
    %v105 = vrot.slane %v97, %v104
    %v108 = vsub.f32 %v49, %v101
    %v109 = vsub.f32 %v52, %v105
    %v110 = vmul.f32 %v108, 1.442695
    %v111 = vpow.pop %v110
    %v112 = vmul.f32 %v109, 1.442695
    %v113 = vpow.pop %v112
    %v114 = vld [vmem:[#allocation3] sm:$0x3]
    %v115 = vmul.f32 %v74, %v114
    %vm116 = vcmask 7168
    %v117 = vsel %vm116, %v111, 0.0
    %v118 = vrot.slane %v117, 4
    %v119 = vadd.f32 %v117, %v118
    %v120 = vrot.slane %v119, 2
    %v121 = vadd.f32 %v119, %v120
    %v122 = vrot.slane %v121, 1
    %v123 = vadd.f32 %v121, %v122
    %v124 = vsel %vm116, %v113, 0.0
    %v125 = vrot.slane %v124, 4
    %v126 = vadd.f32 %v124, %v125
    %v127 = vrot.slane %v126, 2
    %v128 = vadd.f32 %v126, %v127
    %v129 = vrot.slane %v128, 1
    %v130 = vadd.f32 %v128, %v129
    %v133 = vsel %vm68, %v130, %v123
    %v135 = vadd.f32 %v115, %v133
    %vm136 = vcmask 1024
    %137 = vst.msk [vmem:[#allocation3] sm:$0x3] %vm136, %v135
    %v138 = vld [vmem:[#allocation4] sm:$0x3]
    %140 = vset.pattern.permute.xlu0 0
    %141 = vperm.xlu0 %140, %v74
    %v142 = vpop.permute.xlu0 %141
    %v144 = vmul.f32 %v142, %v138
    %146 = vset.pattern.permute.xlu0 0
    %147 = vperm.xlu0 %146, %v111
    %v148 = vpop.permute.xlu0 %147
    %151 = vset.pattern.permute.xlu0 0
    %152 = vperm.xlu0 %151, %v113
    %v153 = vpop.permute.xlu0 %152
    %v155 = vmul.f32 %v148, %v35
    %v156 = vmul.f32 %v153, %v36
    %v157 = vsel %vm46, %v155, 0.0
    %v158 = vrot.slane %v157, 4
    %v159 = vadd.f32 %v157, %v158
    %v160 = vrot.slane %v159, 2
    %v161 = vadd.f32 %v159, %v160
    %v162 = vrot.slane %v161, 1
    %v163 = vadd.f32 %v161, %v162
    %v164 = vsel %vm46, %v156, 0.0
    %v165 = vrot.slane %v164, 4
    %v166 = vadd.f32 %v164, %v165
    %v167 = vrot.slane %v166, 2
    %v168 = vadd.f32 %v166, %v167
    %v169 = vrot.slane %v168, 1
    %v170 = vadd.f32 %v168, %v169
    %v173 = vsel %vm68, %v170, %v163
    %v175 = vadd.f32 %v144, %v173
    %vm176 = vcmask 254976
    %177 = vst.msk [vmem:[#allocation4] sm:$0x3] %vm176, %v175
    %178 = vst.msk [vmem:[#allocation2] sm:$0x3] %vm136, %v71
    // Predicated region
    $region18: #{tpu_custom_call.1} parent=1 // pred_check
      %p179 = pneg %p26
    $region19: #{tpu_custom_call.1} parent=1 // pred_check_branch
      %181 = sbr.rel (%p179) target = $region21
    $region20: #{tpu_custom_call.1} parent=1 // pred_region
      %v182 = vld [vmem:[#allocation4] sm:$0x3]
      %v183 = vld [vmem:[#allocation3] sm:$0x3]
      %185 = vset.pattern.permute.xlu0 0
      %186 = vperm.xlu0 %185, %v183
      %v187 = vpop.permute.xlu0 %186
      %v189 = vrcp.pop %v187
      %v190 = vmul.f32 %v182, %v189
      %191 = vst.msk [vmem:[#allocation8] sm:$0x3] %vm176, %v190
    $region21: #{tpu_custom_call.1} parent=1 // pred_fallthru
      _
    // Predicated region
    $region22: #{tpu_custom_call.1} parent=1 // pred_check
      _
    $region23: #{tpu_custom_call.1} parent=1 // pred_check_branch
      %193 = sbr.rel (0) target = $region25
    $region24: #{tpu_custom_call.1} parent=1 // pred_region
      %s195 = ssub.s32 32, 32
      %196 = vsyncadd [#allocation7], %s195
      %s198 = sshll.u32 [#allocation8], 4
      %s199 = int_to_ptr.vmem [resolvable:$true] %s198
      %201 = dma.vmem_to_hbm [thread:$0]  %s199, 32, %s2, [#allocation7]
    $region25: #{tpu_custom_call.1} parent=1 // pred_fallthru
      _
    // Predicated region
    $region26: #{tpu_custom_call.1} parent=1 // pred_check
      _
    $region27: #{tpu_custom_call.1} parent=1 // pred_check_branch
      %203 = sbr.rel (0) target = $region29
    $region28: #{tpu_custom_call.1} parent=1 // pred_region
      %204 = dma.done [#allocation7], 32
    $region29: #{tpu_custom_call.1} parent=1 // pred_fallthru
      _
    %205 = vsyncpa [#allocation6], 1
    %206 = vsyncpa [#allocation7], 1

</llo_original>
